<compile_context>
chip_gen: v5e
topology: v5e:2x2
jax: 0.10.0
libtpu: 0.0.40
codegen_flags: <defaults>
</compile_context>

<pallas_src>
import functools
import math

import jax
import jax.numpy as jnp
from jax.experimental import pallas as pl
from jax.experimental.pallas import tpu as pltpu


# ----------------------------------------------------------------------------
# In-kernel stateless PRNG (portable: plain uint32 VPU ops, no pltpu.prng_*).
# ----------------------------------------------------------------------------
def _hash32(x):
    """splitmix32-style mix of a uint32 array/scalar."""
    x = (x + jnp.uint32(0x9E3779B9)).astype(jnp.uint32)
    x = (x ^ (x >> 16)) * jnp.uint32(0x85EBCA6B)
    x = (x ^ (x >> 13)) * jnp.uint32(0xC2B2AE35)
    x = x ^ (x >> 16)
    return x


# ----------------------------------------------------------------------------
# Kernel
# ----------------------------------------------------------------------------
def _positional_encoding_kernel(seed_ref, x_ref, pe_ref, o_ref, *,
                                dropout_rate: float, training: bool,
                                tb: int, tf: int, feat_total: int):
    # seed_ref: (1,) int32 in SMEM (scalar prefetch)
    # x_ref:   (TB, TF)  flattened batch/feature tile
    # pe_ref:  (1,  TF)  positional-encoding slab tile (broadcast over batch)
    # o_ref:   (TB, TF)
    y = x_ref[...] + pe_ref[...]

    if training and dropout_rate > 0.0:
        # Stateless counter-based PRNG keyed on (seed, global element index).
        seed = _hash32(seed_ref[0].astype(jnp.uint32))
        b0 = pl.program_id(0) * tb
        f0 = pl.program_id(1) * tf
        row = (jax.lax.broadcasted_iota(jnp.int32, y.shape, 0) + b0).astype(jnp.uint32)
        col = (jax.lax.broadcasted_iota(jnp.int32, y.shape, 1) + f0).astype(jnp.uint32)
        gidx = row * jnp.uint32(feat_total) + col
        bits = _hash32(gidx ^ seed)
        # keep with probability (1 - p): raw uint32 threshold compare.
        thresh = min(int(round((1.0 - dropout_rate) * 2.0 ** 32)), 0xFFFFFFFF)
        keep = bits < jnp.uint32(thresh)
        scale = jnp.asarray(1.0 / (1.0 - dropout_rate), dtype=y.dtype)
        y = jnp.where(keep, y * scale, jnp.zeros_like(y))

    o_ref[...] = y.astype(o_ref.dtype)


# ----------------------------------------------------------------------------
# PE table (same buffer as the PyTorch module, stored as (max_len, d_model))
# ----------------------------------------------------------------------------
def make_positional_encoding_table(d_model: int, max_len: int = 5000):
    assert d_model % 2 == 0, "d_model must be even (matches the PyTorch module)"
    position = jnp.arange(max_len, dtype=jnp.float32)[:, None]
    div_term = jnp.exp(jnp.arange(0, d_model, 2, dtype=jnp.float32)
                       * (-math.log(10000.0) / d_model))
    pe = jnp.zeros((max_len, d_model), dtype=jnp.float32)
    pe = pe.at[:, 0::2].set(jnp.sin(position * div_term))
    pe = pe.at[:, 1::2].set(jnp.cos(position * div_term))
    return pe


# ----------------------------------------------------------------------------
# Tile selection: byte-budget driven, layout-legal, >= 2 grid steps for v7x.
# ----------------------------------------------------------------------------
def _choose_tiles(B, F, itemsize, target_tile_bytes=4 << 20):
    """Pick (TB, TF) for the flattened (B, F) layout.

    Legality: batch (sublane) tile must be a multiple of 8 or the full B;
    feature (lane) tile must be a multiple of 128 or the full F.  Tiles are
    sized to ~target_tile_bytes so 2*(x)+2*(out) double-buffered tiles stay
    far under v7x's 64 MiB VMEM while staying big enough for HBM roofline,
    and the grid is kept >= 2 steps so both v7x TensorCores get work.
    """
    row_bytes = max(1, F * itemsize)

    want_rows = max(1, target_tile_bytes // row_bytes)
    if want_rows >= B:
        TB = B
    elif want_rows >= 8:
        TB = (want_rows // 8) * 8
    else:
        TB = 8 if B >= 8 else B          # feature tiling bounds the tile instead

    n_feat_blocks = max(1, pl.cdiv(TB * row_bytes, target_tile_bytes))
    if pl.cdiv(B, TB) * n_feat_blocks < 2:
        n_feat_blocks = 2                # guarantee >= 2 parallel grid steps
    if n_feat_blocks > 1 and F >= 2 * 128:
        TF = max(128, ((F // n_feat_blocks) // 128) * 128)
    else:
        TF = F
    return TB, TF


# ----------------------------------------------------------------------------
# Wrapper
# ----------------------------------------------------------------------------
def positional_encoding_forward(x, pe_table, *,
                                dropout_rate: float = 0.1,
                                training: bool = False,
                                seed: int = 0,
                                batch_tile: int | None = None,
                                donate_x: bool = False):
    """x: (B, S, D). pe_table: (max_len, D). Returns (B, S, D), dtype of x."""
    B, S, D = x.shape
    assert pe_table.shape[0] >= S and pe_table.shape[1] == D
    F = S * D

    # Lane-dense layout: collapse (S, D) into the last axis so stores are full
    # 128-lane vst's even when d_model < 128 (pure layout plumbing).
    x_flat = x.reshape(B, F)
    # pe cast to x.dtype: the add runs in the input dtype (documented deviation
    # for bf16 inputs).  Only the S needed rows ever hit the DMA path.
    pe_flat = pe_table[:S].astype(x.dtype).reshape(1, F)

    itemsize = x.dtype.itemsize
    TB, TF = _choose_tiles(B, F, itemsize)
    if batch_tile is not None:
        TB = max(1, min(int(batch_tile), B))
    grid = (pl.cdiv(B, TB), pl.cdiv(F, TF))

    # PE block spec: if its block index never changes, single-buffer it.
    pe_constant = (pl.cdiv(F, TF) == 1)
    pe_index_map = (lambda i, j, seed: (0, 0)) if pe_constant \
        else (lambda i, j, seed: (0, j))
    pe_spec = pl.BlockSpec((1, TF), pe_index_map)
    if pe_constant:
        try:
            pe_spec = pl.BlockSpec((1, TF), pe_index_map,
                                   pipeline_mode=pl.Buffered(buffer_count=1))
        except TypeError:
            pass  # older jax without pipeline_mode: keep default double-buffering

    # Explicit scoped-VMEM limit (v5e default is only 16 MiB); derived from the
    # actual double-buffered tile requirement, capped at 64 MiB (v7x physical).
    tile_bytes = TB * TF * itemsize
    needed = 2 * 2 * tile_bytes + 2 * TF * itemsize + (1 << 20)
    vmem_limit = int(min(64 << 20, max(32 << 20, needed)))

    seed_arr = jnp.asarray(seed, dtype=jnp.int32).reshape(1)

    kernel = functools.partial(_positional_encoding_kernel,
                               dropout_rate=float(dropout_rate),
                               training=bool(training),
                               tb=TB, tf=TF, feat_total=F)

    out_flat = pl.pallas_call(
        kernel,
        out_shape=jax.ShapeDtypeStruct((B, F), x.dtype),
        grid_spec=pltpu.PrefetchScalarGridSpec(
            num_scalar_prefetch=1,                    # seed -> SMEM
            grid=grid,
            in_specs=[
                pl.BlockSpec((TB, TF), lambda i, j, seed: (i, j)),   # x
                pe_spec,                                             # pe
            ],
            out_specs=pl.BlockSpec((TB, TF), lambda i, j, seed: (i, j)),
        ),
        compiler_params=pltpu.CompilerParams(
            dimension_semantics=("parallel", "parallel"),
            vmem_limit_bytes=vmem_limit),
        input_output_aliases=({1: 0} if donate_x else {}),
    )(seed_arr, x_flat, pe_flat)

    return out_flat.reshape(B, S, D)


# ----------------------------------------------------------------------------
# Demo / self-check
# ----------------------------------------------------------------------------
if __name__ == "__main__":
    # Small shapes consistent with the module: batch=2, seq_len=8, d_model=32.
    B, S, D = 2, 8, 32

    key = jax.random.PRNGKey(0)
    x = jax.random.normal(key, (B, S, D), dtype=jnp.float32)
    pe_table = make_positional_encoding_table(D, max_len=5000)

    # Eval path (dropout is identity) -- exact match of the PyTorch eval forward.
    out_eval = positional_encoding_forward(x, pe_table,
                                           dropout_rate=0.1, training=False)
    out_eval = jax.block_until_ready(out_eval)

    ref = x + pe_table[:S][None, :, :]
    assert out_eval.shape == (B, S, D)
    assert jnp.allclose(out_eval, ref, atol=1e-6, rtol=1e-6)

    # Training path: every element must be either 0 (dropped) or (x+pe)/(1-p).
    # (RNG stream differs from torch's; only the dropout invariant is checked.)
    p = 0.5
    out_train = positional_encoding_forward(x, pe_table,
                                            dropout_rate=p, training=True,
                                            seed=123)
    out_train = jax.block_until_ready(out_train)
    scaled = ref / (1.0 - p)
    is_zero = jnp.isclose(out_train, 0.0, atol=1e-6)
    is_scaled = jnp.isclose(out_train, scaled, atol=1e-5, rtol=1e-5)
    assert bool(jnp.all(is_zero | is_scaled))

    print("KERNEL_OK")
</pallas_src>

<mosaic_0001>
module attributes {stable_mosaic.version = 11 : i64} {
  func.func @_positional_encoding_kernel(%arg0: i32, %arg1: i32, %arg2: memref<1xi32, #tpu.memory_space<smem>>, %arg3: memref<2x128xf32, #tpu.memory_space<vmem>>, %arg4: memref<1x128xf32, #tpu.memory_space<vmem>>, %arg5: memref<2x128xf32, #tpu.memory_space<vmem>>) attributes {dimension_semantics = [#tpu.dimension_semantics<parallel>, #tpu.dimension_semantics<parallel>], iteration_bounds = array<i64: 1, 2>, scalar_prefetch = 1 : i64, scratch_operands = 0 : i64, tpu.core_type = #tpu.core_type<tc>, window_params = [{transform_indices = @transform_0, window_bounds = array<i64: 2, 128>}, {transform_indices = @transform_1, window_bounds = array<i64: 1, 128>}, {transform_indices = @transform_2, window_bounds = array<i64: 2, 128>}]} {
    %c0 = arith.constant 0 : index
    %c0_0 = arith.constant 0 : index
    %0 = vector.load %arg3[%c0, %c0_0] : memref<2x128xf32, #tpu.memory_space<vmem>>, vector<2x128xf32>
    %c0_1 = arith.constant 0 : index
    %c0_2 = arith.constant 0 : index
    %1 = vector.load %arg4[%c0_1, %c0_2] : memref<1x128xf32, #tpu.memory_space<vmem>>, vector<1x128xf32>
    %2 = vector.broadcast %1 : vector<1x128xf32> to vector<2x128xf32>
    %3 = arith.addf %0, %2 : vector<2x128xf32>
    %c0_3 = arith.constant 0 : index
    %c0_4 = arith.constant 0 : index
    %4 = vector.load %arg5[%c0_3, %c0_4] : memref<2x128xf32, #tpu.memory_space<vmem>>, vector<2x128xf32>
    tpu.vector_store %arg5[%c0_3, %c0_4], %3 {strides = array<i32>} : memref<2x128xf32, #tpu.memory_space<vmem>>, vector<2x128xf32>,
    return
  }
  func.func @transform_0(%arg0: i32, %arg1: i32, %arg2: memref<1xi32, #tpu.memory_space<smem>>) -> (i32, i32) {
    %c0_i32 = arith.constant 0 : i32
    return %arg0, %arg1 : i32, i32
  }
  func.func @transform_1(%arg0: i32, %arg1: i32, %arg2: memref<1xi32, #tpu.memory_space<smem>>) -> (i32, i32) {
    %c0_i32 = arith.constant 0 : i32
    %c0_i32_0 = arith.constant 0 : i32
    return %c0_i32, %arg1 : i32, i32
  }
  func.func @transform_2(%arg0: i32, %arg1: i32, %arg2: memref<1xi32, #tpu.memory_space<smem>>) -> (i32, i32) {
    %c0_i32 = arith.constant 0 : i32
    return %arg0, %arg1 : i32, i32
  }
}

</mosaic_0001>

<llo_original>
// kernel: tpu_custom_call.1
$region0: #{tpu_custom_call.1}
  #allocation0 [shape = 'u32[]', space=smem, size = 0x4, offset = 0x4, fixed_abs, tag = 'smem constant byte address 0x4 - core index']
  #allocation1 [shape = 'u32[72,128]{1,0:T(1,128)}', space=vmem, size = 0x9000, scoped, tag = 'internal scratch']
  #allocation2 [shape = 's32[1]{0}', space=sflag, size = 0x4, scoped, tag = 'scoped memory for tpu_custom_call.1']
  #allocation3 [shape = 's32[1]{0:T(128)S(6)}', space=smem, size = 0x200, scoped, tag = 'prefetched SMEM operand 0']
  %s0 = inlined_call_operand.<no memory space> [shape: s32[1], index: 0, kind: input, shape index: {}]
  %s1 = inlined_call_operand.hbm [shape: f32[2,256], index: 1, kind: input, shape index: {}]
  %s2 = inlined_call_operand.vmem [shape: f32[1,256], index: 2, kind: input, shape index: {}]
  %s3 = inlined_call_operand.hbm [shape: f32[2,256], index: 3, kind: output, shape index: {}]
  %s4 = sld [smem:[#allocation0]]
  $region45: #{tpu_custom_call.1} parent=0
    _
  %s6 = ssub.s32 1, %s4
  %s7 = scalar_select 0, %s6, %s4
  %8 = sst [smem:[#allocation3]] %s0
  $region1: #{tpu_custom_call.1} parent=0
    #allocation4 [shape = 'u8[2048]{0}', space=vmem, size = 0x800, scoped, tag = 'input window, operand 1']
    #allocation5 [shape = 's32[2]{0}', space=sflag, size = 0x8, scoped, tag = 'scoped memory for tpu_custom_call.1']
    #allocation6 [shape = 's32[2]{0}', space=sflag, size = 0x8, scoped, tag = 'scoped memory for tpu_custom_call.1']
    #allocation7 [shape = 'u8[2048]{0}', space=vmem, size = 0x800, scoped, tag = 'output window, operand 0']
    %9 = vsyncpa [#allocation5], 0
    %s10 = scalar_lea.sflag [#allocation5], 1
    %11 = vsyncpa %s10, 0
    %12 = vsyncpa [#allocation6], 0
    %s13 = scalar_lea.sflag [#allocation6], 1
    %14 = vsyncpa %s13, 0
    loop: start=0, step=1, limit=4
    $region2: #{tpu_custom_call.1} parent=1 // loop_pre_header
      _
    $region3: #{tpu_custom_call.1} parent=1 // loop_header
      %s16 = sphi 0, %s20
      %p17 = scmp.ge.s32.totalorder %s16, 4
      %s23 = sphi 0, %s35
      %s24 = sphi 0, %s31
      %s25 = sphi 0, %s23
      %s26 = sphi 0, %s24
      %s27 = sphi 0, %s25
      %s28 = sphi 0, %s26
      %s40 = sphi 0, %s42
      %s43 = sphi 0, %s40
      %s44 = sphi 0, %s43
      %s60 = sphi 0, %s44
      %s66 = sphi 0, %s68
      %s69 = sphi 0, %s66
      %s70 = sphi 0, %s69
      %s86 = sphi 0, %s70
      %s94 = sphi 0, %s96
      %s97 = sphi 0, %s94
      %s98 = sphi 0, %s97
      %s114 = sphi 0, %s98
    $region4: #{tpu_custom_call.1} parent=1 // loop_header_branch
      %19 = sbr.rel (%p17) target = $region8
    $region5: #{tpu_custom_call.1} parent=1 // loop_body
      %s21 = ssub.s32 %s16, 1
      %s22 = ssub.s32 %s16, 2
      %s29 = sadd.s32 1, %s24
      %p30 = scmp.ge.s32.totalorder %s29, 2
      %s31 = scalar_select %p30, 0, %s29
      %s32 = sadd.s32 1, %s23
      %s33 = scalar_select %p30, %s32, %s23
      %p34 = scmp.ge.s32.totalorder %s33, 1
      %s35 = scalar_select %p34, 0, %s33
      %s36 = ssub.s32 %s23, %s35
      %s37 = ssub.s32 %s24, %s31
      %s38 = sor.u32 %s36, %s37
      %p39 = scmp.eq.s32.totalorder %s38, 0
      %s41 = sadd.s32 %s40, 1
      %s42 = scalar_select %p39, %s40, %s41
      %p45 = pneg %p39
      %p46 = scmp.eq.s32.totalorder %s16, 1
      %p47 = por %p45, %p46
      %p48 = scmp.ne.s32.totalorder %s40, %s43
      %p49 = scmp.eq.s32.totalorder %s16, 0
      %p50 = por %p48, %p49
      %p51 = scmp.ne.s32.totalorder %s40, %s43
      %p52 = scmp.eq.s32.totalorder %s21, 1
      %p53 = por %p51, %p52
      %p54 = scmp.ne.s32.totalorder %s43, %s44
      %p55 = scmp.eq.s32.totalorder %s21, 0
      %p56 = por %p54, %p55
      %p57 = scmp.ne.s32.totalorder %s43, %s44
      %p58 = scmp.eq.s32.totalorder %s22, 1
      %p59 = por %p57, %p58
      %p61 = scmp.ne.s32.totalorder %s44, %s60
      %p62 = scmp.eq.s32.totalorder %s22, 0
      %p63 = por %p61, %p62
      %s64 = ssub.s32 %s24, %s31
      %p65 = scmp.eq.s32.totalorder %s64, 0
      %s67 = sadd.s32 %s66, 1
      %s68 = scalar_select %p65, %s66, %s67
      %p71 = pneg %p65
      %p72 = scmp.eq.s32.totalorder %s16, 1
      %p73 = por %p71, %p72
      %p74 = scmp.ne.s32.totalorder %s66, %s69
      %p75 = scmp.eq.s32.totalorder %s16, 0
      %p76 = por %p74, %p75
      %p77 = scmp.ne.s32.totalorder %s66, %s69
      %p78 = scmp.eq.s32.totalorder %s21, 1
      %p79 = por %p77, %p78
      %p80 = scmp.ne.s32.totalorder %s69, %s70
      %p81 = scmp.eq.s32.totalorder %s21, 0
      %p82 = por %p80, %p81
      %p83 = scmp.ne.s32.totalorder %s69, %s70
      %p84 = scmp.eq.s32.totalorder %s22, 1
      %p85 = por %p83, %p84
      %p87 = scmp.ne.s32.totalorder %s70, %s86
      %p88 = scmp.eq.s32.totalorder %s22, 0
      %p89 = por %p87, %p88
      %s90 = ssub.s32 %s23, %s35
      %s91 = ssub.s32 %s24, %s31
      %s92 = sor.u32 %s90, %s91
      %p93 = scmp.eq.s32.totalorder %s92, 0
      %s95 = sadd.s32 %s94, 1
      %s96 = scalar_select %p93, %s94, %s95
      %p99 = pneg %p93
      %p100 = scmp.eq.s32.totalorder %s16, 1
      %p101 = por %p99, %p100
      %p102 = scmp.ne.s32.totalorder %s94, %s97
      %p103 = scmp.eq.s32.totalorder %s16, 0
      %p104 = por %p102, %p103
      %p105 = scmp.ne.s32.totalorder %s94, %s97
      %p106 = scmp.eq.s32.totalorder %s21, 1
      %p107 = por %p105, %p106
      %p108 = scmp.ne.s32.totalorder %s97, %s98
      %p109 = scmp.eq.s32.totalorder %s21, 0
      %p110 = por %p108, %p109
      %p111 = scmp.ne.s32.totalorder %s97, %s98
      %p112 = scmp.eq.s32.totalorder %s22, 1
      %p113 = por %p111, %p112
      %p115 = scmp.ne.s32.totalorder %s98, %s114
      %p116 = scmp.eq.s32.totalorder %s22, 0
      %p117 = por %p115, %p116
      %p118 = scmp.le.s32.totalorder 1, %s16
      %p119 = scmp.lt.s32.totalorder %s16, 3
      %p120 = pnand %p118, %p119
      %p121 = pneg %p120
      // Predicated region
      $region9: #{tpu_custom_call.1} parent=5 // pred_check
        _
      $region10: #{tpu_custom_call.1} parent=5 // pred_check_branch
        %123 = sbr.rel (%p120) target = $region12
      $region11: #{tpu_custom_call.1} parent=5 // pred_region
        %s124 = ssub.s32 %s16, 1
      $region12: #{tpu_custom_call.1} parent=5 // pred_fallthru
        _
      %p125 = scmp.lt.s32.totalorder %s16, 2
      // Predicated region
      $region13: #{tpu_custom_call.1} parent=5 // pred_check
        %p126 = pneg %p125
      $region14: #{tpu_custom_call.1} parent=5 // pred_check_branch
        %128 = sbr.rel (%p126) target = $region16
      $region15: #{tpu_custom_call.1} parent=5 // pred_region
        // Predicated region
        $region17: #{tpu_custom_call.1} parent=15 // pred_check
          %p129 = pneg %p50
        $region18: #{tpu_custom_call.1} parent=15 // pred_check_branch
          %131 = sbr.rel (%p129) target = $region20
        $region19: #{tpu_custom_call.1} parent=15 // pred_region
          %s132 = sand.u32 %s40, 1
          %s133 = scalar_lea.sflag [#allocation5], %s132
          %s134 = sand.u32 %s40, 1
          %s135 = smul.addr %s134, 2
          %s136 = scalar_lea.vmem [#allocation4], %s135
          %138 = vsyncadd %s133, 0
          %s139 = smul.addr %s23, 2
          %s140 = sadd.s32 %s24, %s139
          %s141 = smul.addr %s140, 2
          %s142 = scalar_lea.hbm %s1, %s141
          %s144 = sshll.u32 %s142, 4
          %s145 = int_to_ptr.hbm [resolvable:$true] %s144
          %s146 = sshll.u32 %s136, 4
          %s147 = int_to_ptr.vmem [resolvable:$true] %s146
          %149 = dma.hbm_to_vmem [thread:$0]  %s145, 32, %s147, %s133
        $region20: #{tpu_custom_call.1} parent=15 // pred_fallthru
          _
        // Predicated region
        $region21: #{tpu_custom_call.1} parent=15 // pred_check
          %p150 = pneg %p76
        $region22: #{tpu_custom_call.1} parent=15 // pred_check_branch
          %152 = sbr.rel (%p150) target = $region24
        $region23: #{tpu_custom_call.1} parent=15 // pred_region
          %p153 = scmp.lt.s32.totalorder %s24, 1
          %s154 = scalar_select %p153, %s24, 1
          %s155 = scalar_lea.vmem %s2, %s154
        $region24: #{tpu_custom_call.1} parent=15 // pred_fallthru
          _
      $region16: #{tpu_custom_call.1} parent=5 // pred_fallthru
        _
      %p156 = scmp.le.s32.totalorder 1, %s16
      %p157 = scmp.lt.s32.totalorder %s16, 3
      %p158 = pnand %p156, %p157
      %p159 = pneg %p158
      // Predicated region
      $region25: #{tpu_custom_call.1} parent=5 // pred_check
        _
      $region26: #{tpu_custom_call.1} parent=5 // pred_check_branch
        %161 = sbr.rel (%p158) target = $region28
      $region27: #{tpu_custom_call.1} parent=5 // pred_region
        %s162 = ssub.s32 %s16, 1
        %s163 = sand.u32 %s43, 1
        %s164 = scalar_lea.sflag [#allocation5], %s163
        %s165 = sand.u32 %s43, 1
        %s166 = smul.addr %s165, 2
        %s167 = scalar_lea.vmem [#allocation4], %s166
        // Predicated region
        $region29: #{tpu_custom_call.1} parent=27 // pred_check
          %p168 = pneg %p56
        $region30: #{tpu_custom_call.1} parent=27 // pred_check_branch
          %170 = sbr.rel (%p168) target = $region32
        $region31: #{tpu_custom_call.1} parent=27 // pred_region
          %172 = dma.done %s164, 32
        $region32: #{tpu_custom_call.1} parent=27 // pred_fallthru
          _
        %s173 = sand.u32 %s43, 1
        %s174 = scalar_lea.sflag [#allocation5], %s173
        %s175 = sand.u32 %s43, 1
        %s176 = smul.addr %s175, 2
        %s177 = scalar_lea.vmem [#allocation4], %s176
        %p178 = pneg %p56
        %p179 = pneg %p53
        %p180 = scmp.lt.s32.totalorder %s26, 1
        %s181 = scalar_select %p180, %s26, 1
        %s182 = scalar_lea.vmem %s2, %s181
        %p183 = pneg %p82
        %p184 = pneg %p79
        %p185 = pneg %p110
        %p186 = pneg %p107
        %s187 = sand.u32 %s97, 1
        %s188 = scalar_lea.sflag [#allocation6], %s187
        %s189 = sand.u32 %s97, 1
        %s190 = smul.addr %s189, 2
        %s191 = scalar_lea.vmem [#allocation7], %s190
        %p192 = scmp.lt.s32.totalorder %s26, 1
        %s193 = scalar_select %p192, %s26, 1
        %s194 = scalar_lea.vmem %s2, %s193
        %v195 = vld [vmem:[%s167] sm:$0x3]
        %v196 = vld [vmem:[%s194] sm:$0x1]
        %v198 = vperm.slane %v196, 0
        %v200 = vadd.f32 %v195, %v198
        %201 = vst [vmem:[%s191] sm:$0x3] %v200
        %s202 = sand.u32 %s97, 1
        %s203 = scalar_lea.sflag [#allocation6], %s202
        %s204 = sand.u32 %s97, 1
        %s205 = smul.addr %s204, 2
        %s206 = scalar_lea.vmem [#allocation7], %s205
        // Predicated region
        $region33: #{tpu_custom_call.1} parent=27 // pred_check
          %p207 = pneg %p107
        $region34: #{tpu_custom_call.1} parent=27 // pred_check_branch
          %209 = sbr.rel (%p207) target = $region36
        $region35: #{tpu_custom_call.1} parent=27 // pred_region
          %211 = vsyncadd %s203, 0
          %s212 = smul.addr %s25, 2
          %s213 = sadd.s32 %s26, %s212
          %s214 = smul.addr %s213, 2
          %s215 = scalar_lea.hbm %s3, %s214
          %s217 = sshll.u32 %s206, 4
          %s218 = int_to_ptr.vmem [resolvable:$true] %s217
          %s219 = sshll.u32 %s215, 4
          %s220 = int_to_ptr.hbm [resolvable:$true] %s219
          %222 = dma.vmem_to_hbm [thread:$0]  %s218, 32, %s220, %s203
        $region36: #{tpu_custom_call.1} parent=27 // pred_fallthru
          _
      $region28: #{tpu_custom_call.1} parent=5 // pred_fallthru
        _
      %p223 = scmp.le.s32.totalorder 2, %s16
      // Predicated region
      $region37: #{tpu_custom_call.1} parent=5 // pred_check
        %p224 = pneg %p223
      $region38: #{tpu_custom_call.1} parent=5 // pred_check_branch
        %226 = sbr.rel (%p224) target = $region40
      $region39: #{tpu_custom_call.1} parent=5 // pred_region
        %s227 = ssub.s32 %s16, 2
        // Predicated region
        $region41: #{tpu_custom_call.1} parent=39 // pred_check
          %p228 = pneg %p113
        $region42: #{tpu_custom_call.1} parent=39 // pred_check_branch
          %230 = sbr.rel (%p228) target = $region44
        $region43: #{tpu_custom_call.1} parent=39 // pred_region
          %s231 = sand.u32 %s98, 1
          %s232 = scalar_lea.sflag [#allocation6], %s231
          %s233 = sand.u32 %s98, 1
          %s234 = smul.addr %s233, 2
          %s235 = scalar_lea.vmem [#allocation7], %s234
          %237 = dma.done %s232, 32
        $region44: #{tpu_custom_call.1} parent=39 // pred_fallthru
          _
      $region40: #{tpu_custom_call.1} parent=5 // pred_fallthru
        _
    $region6: #{tpu_custom_call.1} parent=1 // loop_footer
      %s20 = sadd.s32 1, %s16
    $region7: #{tpu_custom_call.1} parent=1 // loop_footer_branch
      %15 = sbr.rel target = $region3
    $region8: #{tpu_custom_call.1} parent=1 // loop_exit
      _
    %238 = vsyncpa [#allocation5], 1
    %s239 = scalar_lea.sflag [#allocation5], 1
    %240 = vsyncpa %s239, 1
    %241 = vsyncpa [#allocation6], 1
    %s242 = scalar_lea.sflag [#allocation6], 1
    %243 = vsyncpa %s242, 1

</llo_original>
